<compile_context>
chip_gen: v7x
topology: tpu7x:2x2x1
jax: 0.10.0
libtpu: 0.0.40
codegen_flags: <defaults>
</compile_context>

<pallas_src>
import functools

import numpy as np
import jax
import jax.numpy as jnp
from jax.experimental import pallas as pl
from jax.experimental.pallas import tpu as pltpu


def _round_up(x, m):
    return ((x + m - 1) // m) * m


def _pool_kernel(pa_ref, pb_ref, xa_ref, xb_ref, o_ref):
    # (tTo, 2*tTo) @ (2*tTo, TF)  +  (tTo, halo_p) @ (halo_p, TF)  on the MXU.
    acc = jnp.dot(pa_ref[...], xa_ref[...], preferred_element_type=jnp.float32)
    acc = acc + jnp.dot(pb_ref[...], xb_ref[...], preferred_element_type=jnp.float32)
    o_ref[...] = acc.astype(o_ref.dtype)


@functools.partial(jax.jit, static_argnames=("kernel_size",))
def pool_forward(x, kernel_size):
    """AvgPool1d(K, stride=2, pad=(K-1)//2) along axis 0 of a (T, B, C) array."""
    T, B, C = x.shape
    K = int(kernel_size)
    pad = (K - 1) // 2
    T_out = (T + 2 * pad - K) // 2 + 1

    # ---- feature (lane) tiling: flatten (B, C) -> F on the lane axis ----
    F = B * C
    F_p = _round_up(F, 128)
    if F_p <= 2048:
        TF = F_p                      # single wide, lane-dense feature tile
    else:
        TF = 1024
        F_p = _round_up(F_p, TF)
    nF = F_p // TF

    # ---- time tiling: tTo output rows <- 2*tTo input rows + halo_p halo rows ----
    halo_p = _round_up(max(K - 2, 1), 8)          # rows spilling into next tile
    tTo = max(8, min(128, _round_up(T_out, 8)))
    tTo = _round_up(tTo, halo_p)                   # so 2*tTo % halo_p == 0
    T_out_p = _round_up(T_out, tTo)
    nTo = T_out_p // tTo
    tT = 2 * tTo
    b_step = tT // halo_p                          # halo block-index stride

    # Zero-padded time axis: `pad` zeros in front (AvgPool left pad), then x,
    # then zeros out to L_pad.  Rows of x (if any) beyond L_pad - pad are never
    # read by valid output windows, so truncation there is safe.
    L_pad = nTo * tT + halo_p
    n_copy = min(T, L_pad - pad)
    x2 = x.reshape(T, F)
    xp = jnp.zeros((L_pad, F_p), x.dtype)
    xp = xp.at[pad:pad + n_copy, :F].set(x2[:n_copy])

    # ---- tile-invariant banded pooling matrices (compile-time constants) ----
    P_A = np.zeros((tTo, tT), np.float32)
    P_B = np.zeros((tTo, halo_p), np.float32)
    inv_k = np.float32(1.0 / K)        # count_include_pad=True -> always 1/K
    for r in range(tTo):
        for k in range(K):
            c = 2 * r + k
            if c < tT:
                P_A[r, c] = inv_k
            elif c - tT < halo_p:
                P_B[r, c - tT] = inv_k
    P_A = jnp.asarray(P_A)
    P_B = jnp.asarray(P_B)

    cost = pl.CostEstimate(
        flops=2 * T_out_p * F_p * (tT + halo_p),
        transcendentals=0,
        bytes_accessed=4 * F_p * (L_pad + nTo * halo_p + T_out_p),
    )

    out = pl.pallas_call(
        _pool_kernel,
        out_shape=jax.ShapeDtypeStruct((T_out_p, F_p), x.dtype),
        grid_spec=pltpu.PrefetchScalarGridSpec(
            num_scalar_prefetch=0,
            grid=(nTo, nF),
            in_specs=[
                # resident constants: same block every step -> fetched once
                pl.BlockSpec((tTo, tT), lambda i, j: (0, 0)),
                pl.BlockSpec((tTo, halo_p), lambda i, j: (0, 0)),
                # main input tile: rows [i*tT, (i+1)*tT)
                pl.BlockSpec((tT, TF), lambda i, j: (i, j)),
                # halo tile: rows [(i+1)*tT, (i+1)*tT + halo_p)
                pl.BlockSpec((halo_p, TF), lambda i, j: ((i + 1) * b_step, j)),
            ],
            out_specs=pl.BlockSpec((tTo, TF), lambda i, j: (i, j)),
        ),
        compiler_params=pltpu.CompilerParams(
            dimension_semantics=("parallel", "parallel"),
        ),
        cost_estimate=cost,
    )(P_A, P_B, xp, xp)

    return out[:T_out, :F].reshape(T_out, B, C)


def _reference_pool(x_np, kernel_size):
    """Pure-numpy replica of AvgPool1d(K, stride=2, pad=(K-1)//2) on (T,B,C)."""
    T, B, C = x_np.shape
    pad = (kernel_size - 1) // 2
    T_out = (T + 2 * pad - kernel_size) // 2 + 1
    xp = np.zeros((T + 2 * pad, B, C), dtype=np.float32)
    xp[pad:pad + T] = x_np
    out = np.zeros((T_out, B, C), dtype=np.float32)
    for t in range(T_out):
        out[t] = xp[2 * t: 2 * t + kernel_size].sum(axis=0) / kernel_size
    return out


if __name__ == "__main__":
    kernel_size = 4           # AvgPool1d(kernel_size=4, stride=2, padding=1)
    T, B, C = 16, 2, 32       # small test shapes: (time, batch, channels)

    key = jax.random.PRNGKey(0)
    x = jax.random.normal(key, (T, B, C), dtype=jnp.float32)

    y = pool_forward(x, kernel_size)
    y = jax.block_until_ready(y)

    y_ref = _reference_pool(np.asarray(x), kernel_size)
    assert y.shape == y_ref.shape, (y.shape, y_ref.shape)
    np.testing.assert_allclose(np.asarray(y), y_ref, rtol=1e-5, atol=1e-5)

    print("KERNEL_OK")
</pallas_src>

<mosaic_0001>
module attributes {stable_mosaic.version = 11 : i64} {
  func.func @_pool_kernel(%arg0: i32, %arg1: i32, %arg2: memref<8x16xf32, #tpu.memory_space<vmem>>, %arg3: memref<8x8xf32, #tpu.memory_space<vmem>>, %arg4: memref<16x128xf32, #tpu.memory_space<vmem>>, %arg5: memref<8x128xf32, #tpu.memory_space<vmem>>, %arg6: memref<8x128xf32, #tpu.memory_space<vmem>>) attributes {dimension_semantics = [#tpu.dimension_semantics<parallel>, #tpu.dimension_semantics<parallel>], iteration_bounds = array<i64: 1, 1>, scalar_prefetch = 0 : i64, scratch_operands = 0 : i64, tpu.core_type = #tpu.core_type<tc>, window_params = [{pipeline_mode = #tpu.pipeline_mode<synchronous>, transform_indices = @transform_0, window_bounds = array<i64: 8, 16>}, {pipeline_mode = #tpu.pipeline_mode<synchronous>, transform_indices = @transform_1, window_bounds = array<i64: 8, 8>}, {transform_indices = @transform_2, window_bounds = array<i64: 16, 128>}, {transform_indices = @transform_3, window_bounds = array<i64: 8, 128>}, {transform_indices = @transform_4, window_bounds = array<i64: 8, 128>}]} {
    %c0 = arith.constant 0 : index
    %c0_0 = arith.constant 0 : index
    %0 = vector.load %arg2[%c0, %c0_0] : memref<8x16xf32, #tpu.memory_space<vmem>>, vector<8x16xf32>
    %c0_1 = arith.constant 0 : index
    %c0_2 = arith.constant 0 : index
    %1 = vector.load %arg4[%c0_1, %c0_2] : memref<16x128xf32, #tpu.memory_space<vmem>>, vector<16x128xf32>
    %cst = arith.constant dense<0.000000e+00> : vector<8x128xf32>
    %2 = tpu.matmul %0, %1, %cst {dimension_numbers = #tpu.dot_dimension_numbers<[1], [0], [0], [1], [0, 0, 1, 1], [], []>} : vector<8x16xf32>, vector<16x128xf32>, vector<8x128xf32> -> vector<8x128xf32>
    %c0_3 = arith.constant 0 : index
    %c0_4 = arith.constant 0 : index
    %3 = vector.load %arg3[%c0_3, %c0_4] : memref<8x8xf32, #tpu.memory_space<vmem>>, vector<8x8xf32>
    %c0_5 = arith.constant 0 : index
    %c0_6 = arith.constant 0 : index
    %4 = vector.load %arg5[%c0_5, %c0_6] : memref<8x128xf32, #tpu.memory_space<vmem>>, vector<8x128xf32>
    %cst_7 = arith.constant dense<0.000000e+00> : vector<8x128xf32>
    %5 = tpu.matmul %3, %4, %cst_7 {dimension_numbers = #tpu.dot_dimension_numbers<[1], [0], [0], [1], [0, 0, 1, 1], [], []>} : vector<8x8xf32>, vector<8x128xf32>, vector<8x128xf32> -> vector<8x128xf32>
    %6 = arith.addf %2, %5 : vector<8x128xf32>
    %c0_8 = arith.constant 0 : index
    %c0_9 = arith.constant 0 : index
    %7 = vector.load %arg6[%c0_8, %c0_9] : memref<8x128xf32, #tpu.memory_space<vmem>>, vector<8x128xf32>
    tpu.vector_store %arg6[%c0_8, %c0_9], %6 {strides = array<i32>} : memref<8x128xf32, #tpu.memory_space<vmem>>, vector<8x128xf32>,
    return
  }
  func.func @transform_0(%arg0: i32, %arg1: i32) -> (i32, i32) {
    %c0_i32 = arith.constant 0 : i32
    %c0_i32_0 = arith.constant 0 : i32
    %c0_i32_1 = arith.constant 0 : i32
    return %c0_i32, %c0_i32_0 : i32, i32
  }
  func.func @transform_1(%arg0: i32, %arg1: i32) -> (i32, i32) {
    %c0_i32 = arith.constant 0 : i32
    %c0_i32_0 = arith.constant 0 : i32
    %c0_i32_1 = arith.constant 0 : i32
    return %c0_i32, %c0_i32_0 : i32, i32
  }
  func.func @transform_2(%arg0: i32, %arg1: i32) -> (i32, i32) {
    %c0_i32 = arith.constant 0 : i32
    return %arg0, %arg1 : i32, i32
  }
  func.func @transform_3(%arg0: i32, %arg1: i32) -> (i32, i32) {
    %c1_i32 = arith.constant 1 : i32
    %0 = arith.addi %arg0, %c1_i32 : i32
    %c2_i32 = arith.constant 2 : i32
    %1 = arith.muli %0, %c2_i32 : i32
    %c0_i32 = arith.constant 0 : i32
    return %1, %arg1 : i32, i32
  }
  func.func @transform_4(%arg0: i32, %arg1: i32) -> (i32, i32) {
    %c0_i32 = arith.constant 0 : i32
    return %arg0, %arg1 : i32, i32
  }
}

</mosaic_0001>

<llo_original>
// kernel: pool_forward.1
$region0: #{pool_forward.1}
  #allocation0 [shape = 'u32[]', space=smem, size = 0x4, offset = 0x4, fixed_abs, tag = 'smem constant byte address 0x4 - core index']
  #allocation1 [shape = 'u32[144,128]{1,0:T(1,128)}', space=vmem, size = 0x12000, scoped, tag = 'internal scratch']
  %s0 = inlined_call_operand.vmem [shape: f32[8,16], index: 0, kind: input, shape index: {}]
  %s1 = inlined_call_operand.vmem [shape: f32[8,8], index: 1, kind: input, shape index: {}]
  %s2 = inlined_call_operand.vmem [shape: f32[24,128], index: 2, kind: input, shape index: {}, may-alias: {2,3}]
  %s3 = inlined_call_operand.vmem [shape: f32[24,128], index: 3, kind: input, shape index: {}, may-alias: {2,3}]
  %s4 = inlined_call_operand.vmem [shape: f32[8,128], index: 4, kind: output, shape index: {}]
  %s5 = sld [smem:[#allocation0]]
  $region26: #{pool_forward.1} parent=0
    _
  %s7 = ssub.s32 1, %s5
  %s8 = scalar_select 0, %s7, %s5
  // Predicated region
  $region2: #{pool_forward.1} parent=0 // pred_check
    _
  $region3: #{pool_forward.1} parent=0 // pred_check_branch
    %10 = sbr.rel (0) target = $region5
  $region4: #{pool_forward.1} parent=0 // pred_region
    _
  $region5: #{pool_forward.1} parent=0 // pred_fallthru
    _
  // Predicated region
  $region6: #{pool_forward.1} parent=0 // pred_check
    _
  $region7: #{pool_forward.1} parent=0 // pred_check_branch
    %12 = sbr.rel (0) target = $region9
  $region8: #{pool_forward.1} parent=0 // pred_region
    _
  $region9: #{pool_forward.1} parent=0 // pred_fallthru
    _
  // Predicated region
  $region10: #{pool_forward.1} parent=0 // pred_check
    _
  $region11: #{pool_forward.1} parent=0 // pred_check_branch
    %14 = sbr.rel (0) target = $region13
  $region12: #{pool_forward.1} parent=0 // pred_region
    _
  $region13: #{pool_forward.1} parent=0 // pred_fallthru
    _
  // Predicated region
  $region14: #{pool_forward.1} parent=0 // pred_check
    _
  $region15: #{pool_forward.1} parent=0 // pred_check_branch
    %16 = sbr.rel (0) target = $region17
  $region16: #{pool_forward.1} parent=0 // pred_region
    %s17 = sadd.s32 0, 1
    %s18 = smul.u32 %s17, 2
    %p19 = scmp.lt.s32.totalorder %s18, 2
    %s20 = scalar_select %p19, %s18, 2
    %s21 = smul.addr %s20, 8
    %s22 = scalar_lea.vmem %s3, %s21
    %s23 = sadd.s32 0, 1
    %s24 = smul.u32 %s23, 2
  $region17: #{pool_forward.1} parent=0 // pred_fallthru
    _
  %s25 = sadd.s32 0, 1
  %s26 = smul.u32 %s25, 2
  %p27 = scmp.lt.s32.totalorder %s26, 2
  %s28 = scalar_select %p27, %s26, 2
  %s29 = smul.addr %s28, 8
  %s30 = scalar_lea.vmem %s3, %s29
  %s31 = sadd.s32 0, 1
  %s32 = smul.u32 %s31, 2
  %p33 = scmp.lt.s32.totalorder %s32, 2
  %s34 = scalar_select %p33, %s32, 2
  %s35 = smul.addr %s34, 8
  %s36 = scalar_lea.vmem %s3, %s35
  %s37 = sadd.s32 0, 1
  %s38 = smul.u32 %s37, 2
  %v39 = vld [vmem:[%s0] sm:$0xff]
  %v40 = vld [vmem:[%s2] sm:$0xff]
  %v41 = vld [vmem:[%s2 + $0x8] sm:$0xff]
  %v42 = vld [vmem:[%s1] sm:$0xff]
  %v43 = vld [vmem:[%s36] sm:$0xff]
  %vm44 = vcmask 64512
  %v46 = vsel %vm44, %v42, 0
  %48 = vmatprep.subr.mxu0 0.0
  %49 = vmatpush1.msra.mxu0 %v43
  %50 = vmatprep.subr.mxu0 0.0
  %51 = vmatpush1.msra.mxu0 0.0
  %52 = vmatprep.subr.mxu0 0.0
  %53 = vmatpush1.msra.mxu0 0.0
  %54 = vmatprep.subr.mxu0 0.0
  %55 = vmatpush1.msra.mxu0 0.0
  %56 = vmatprep.subr.mxu0 0.0
  %57 = vmatpush1.msra.mxu0 0.0
  %58 = vmatprep.subr.mxu0 0.0
  %59 = vmatpush1.msra.mxu0 0.0
  %60 = vmatprep.subr.mxu0 0.0
  %61 = vmatpush1.msra.mxu0 0.0
  %62 = vmatprep.subr.mxu0 0.0
  %63 = vmatpush1.msra.mxu0 0.0
  %64 = vmatprep.subr.mxu0 0.0
  %65 = vmatpush1.msra.mxu0 0.0
  %66 = vmatprep.subr.mxu0 0.0
  %67 = vmatpush1.msra.mxu0 0.0
  %68 = vmatprep.subr.mxu0 0.0
  %69 = vmatpush1.msra.mxu0 0.0
  %70 = vmatprep.subr.mxu0 0.0
  %71 = vmatpush1.msra.mxu0 0.0
  %72 = vmatprep.subr.mxu0 0.0
  %73 = vmatpush1.msra.mxu0 0.0
  %74 = vmatprep.subr.mxu0 0.0
  %75 = vmatpush1.msra.mxu0 0.0
  %76 = vmatprep.subr.mxu0 0.0
  %77 = vmatpush1.msra.mxu0 0.0
  %78 = vmatprep.subr.mxu0 0.0
  %79 = vmatpush1.msra.mxu0 0.0
  %80 = vmatprep.subr.mxu0 0.0
  %81 = vmatpush1.msra.mxu0 0.0
  %82 = vmatprep.subr.mxu0 0.0
  %83 = vmatpush1.msra.mxu0 0.0
  %84 = vmatprep.subr.mxu0 0.0
  %85 = vmatpush1.msra.mxu0 0.0
  %86 = vmatprep.subr.mxu0 0.0
  %87 = vmatpush1.msra.mxu0 0.0
  %88 = vmatprep.subr.mxu0 0.0
  %89 = vmatpush1.msra.mxu0 0.0
  %90 = vmatprep.subr.mxu0 0.0
  %91 = vmatpush1.msra.mxu0 0.0
  %92 = vmatprep.subr.mxu0 0.0
  %93 = vmatpush1.msra.mxu0 0.0
  %94 = vmatprep.subr.mxu0 0.0
  %95 = vmatpush1.msra.mxu0 0.0
  %96 = vmatprep.subr.mxu0 0.0
  %97 = vmatpush1.msra.mxu0 0.0
  %98 = vmatprep.subr.mxu0 0.0
  %99 = vmatpush1.msra.mxu0 0.0
  %100 = vmatprep.subr.mxu0 0.0
  %101 = vmatpush1.msra.mxu0 0.0
  %102 = vmatprep.subr.mxu0 0.0
  %103 = vmatpush1.msra.mxu0 0.0
  %104 = vmatprep.subr.mxu0 0.0
  %105 = vmatpush1.msra.mxu0 0.0
  %106 = vmatprep.subr.mxu0 0.0
  %107 = vmatpush1.msra.mxu0 0.0
  %108 = vmatprep.subr.mxu0 0.0
  %109 = vmatpush1.msra.mxu0 0.0
  %110 = vmatprep.subr.mxu0 0.0
  %111 = vmatpush1.msra.mxu0 0.0
  %112 = vmatprep.mubr.f32.mxu0 0.0
  %113 = vmatmul.mubr.f32.gmra.mrb[0].mxu0 %v46
  %v114 = vpop.f32.mrb[0].mxu0
  %v115 = vadd.f32 0.0, %v114
  %v116 = vpop.f32.mrb[0].mxu0
  %117 = vdwg.mxu0
  %vm118 = vcmask 130048
  %v120 = vsel %vm118, %v39, 0
  %122 = vmatprep.subr.mxu0 0.0
  %123 = vmatpush1.msra.mxu0 %v40
  %124 = vmatprep.subr.mxu0 0.0
  %125 = vmatpush1.msra.mxu0 %v41
  %126 = vmatprep.subr.mxu0 0.0
  %127 = vmatpush1.msra.mxu0 0.0
  %128 = vmatprep.subr.mxu0 0.0
  %129 = vmatpush1.msra.mxu0 0.0
  %130 = vmatprep.subr.mxu0 0.0
  %131 = vmatpush1.msra.mxu0 0.0
  %132 = vmatprep.subr.mxu0 0.0
  %133 = vmatpush1.msra.mxu0 0.0
  %134 = vmatprep.subr.mxu0 0.0
  %135 = vmatpush1.msra.mxu0 0.0
  %136 = vmatprep.subr.mxu0 0.0
  %137 = vmatpush1.msra.mxu0 0.0
  %138 = vmatprep.subr.mxu0 0.0
  %139 = vmatpush1.msra.mxu0 0.0
  %140 = vmatprep.subr.mxu0 0.0
  %141 = vmatpush1.msra.mxu0 0.0
  %142 = vmatprep.subr.mxu0 0.0
  %143 = vmatpush1.msra.mxu0 0.0
  %144 = vmatprep.subr.mxu0 0.0
  %145 = vmatpush1.msra.mxu0 0.0
  %146 = vmatprep.subr.mxu0 0.0
  %147 = vmatpush1.msra.mxu0 0.0
  %148 = vmatprep.subr.mxu0 0.0
  %149 = vmatpush1.msra.mxu0 0.0
  %150 = vmatprep.subr.mxu0 0.0
  %151 = vmatpush1.msra.mxu0 0.0
  %152 = vmatprep.subr.mxu0 0.0
  %153 = vmatpush1.msra.mxu0 0.0
  %154 = vmatprep.subr.mxu0 0.0
  %155 = vmatpush1.msra.mxu0 0.0
  %156 = vmatprep.subr.mxu0 0.0
  %157 = vmatpush1.msra.mxu0 0.0
  %158 = vmatprep.subr.mxu0 0.0
  %159 = vmatpush1.msra.mxu0 0.0
  %160 = vmatprep.subr.mxu0 0.0
  %161 = vmatpush1.msra.mxu0 0.0
  %162 = vmatprep.subr.mxu0 0.0
  %163 = vmatpush1.msra.mxu0 0.0
  %164 = vmatprep.subr.mxu0 0.0
  %165 = vmatpush1.msra.mxu0 0.0
  %166 = vmatprep.subr.mxu0 0.0
  %167 = vmatpush1.msra.mxu0 0.0
  %168 = vmatprep.subr.mxu0 0.0
  %169 = vmatpush1.msra.mxu0 0.0
  %170 = vmatprep.subr.mxu0 0.0
  %171 = vmatpush1.msra.mxu0 0.0
  %172 = vmatprep.subr.mxu0 0.0
  %173 = vmatpush1.msra.mxu0 0.0
  %174 = vmatprep.subr.mxu0 0.0
  %175 = vmatpush1.msra.mxu0 0.0
  %176 = vmatprep.subr.mxu0 0.0
  %177 = vmatpush1.msra.mxu0 0.0
  %178 = vmatprep.subr.mxu0 0.0
  %179 = vmatpush1.msra.mxu0 0.0
  %180 = vmatprep.subr.mxu0 0.0
  %181 = vmatpush1.msra.mxu0 0.0
  %182 = vmatprep.subr.mxu0 0.0
  %183 = vmatpush1.msra.mxu0 0.0
  %184 = vmatprep.subr.mxu0 0.0
  %185 = vmatpush1.msra.mxu0 0.0
  %186 = vmatprep.mubr.f32.mxu0 0.0
  %187 = vmatmul.mubr.f32.gmra.mrb[0].mxu0 %v120
  %v188 = vpop.f32.mrb[0].mxu0
  %v189 = vadd.f32 %v115, %v188
  %v190 = vpop.f32.mrb[0].mxu0
  %191 = vdwg.mxu0
  %192 = vst [vmem:[%s4] sm:$0xff] %v189
  // Predicated region
  $region18: #{pool_forward.1} parent=0 // pred_check
    _
  $region19: #{pool_forward.1} parent=0 // pred_check_branch
    %194 = sbr.rel (0) target = $region21
  $region20: #{pool_forward.1} parent=0 // pred_region
    _
  $region21: #{pool_forward.1} parent=0 // pred_fallthru
    _
  // Predicated region
  $region22: #{pool_forward.1} parent=0 // pred_check
    _
  $region23: #{pool_forward.1} parent=0 // pred_check_branch
    %196 = sbr.rel (0) target = $region25
  $region24: #{pool_forward.1} parent=0 // pred_region
    _
  $region25: #{pool_forward.1} parent=0 // pred_fallthru
    _

</llo_original>
